<compile_context>
chip_gen: v5e
topology: v5e:2x2
jax: 0.10.0
libtpu: 0.0.40
codegen_flags: <defaults>
</compile_context>

<pallas_src>
import jax
import jax.numpy as jnp
from jax.experimental import pallas as pl
from jax.experimental.pallas import tpu as pltpu

_LANES = 128
_TARGET_BLOCK_BYTES = 2 * 1024 * 1024  # ~2 MiB per operand per grid step


def _sublane_multiple(dtype) -> int:
    # Native packed-vreg sublane tile: 8 for 32-bit, 16 for bf16, 32 for 8-bit.
    itemsize = jnp.dtype(dtype).itemsize
    return max(8, 32 // itemsize)


def _lerp_kernel(w_ref, x_ref, e_ref, o_ref):
    # w_ref: (1,) float32 in SMEM (raw learnable weight, untiled across grid).
    # x_ref / e_ref / o_ref: (block_rows, 128) lane-dense VMEM blocks.
    x = x_ref[...]
    e = e_ref[...]
    w = (0.5 + w_ref[0]).astype(x.dtype)   # (0.5 + self.weight).to(input.dtype)
    o_ref[...] = x + w * (e - x)           # torch.lerp(input, end, w)


@jax.jit
def lerp_forward(x: jax.Array, end: jax.Array, weight: jax.Array) -> jax.Array:
    """Equivalent of Lerp.forward(input, end) with the module's scalar weight."""
    assert x.shape == end.shape and x.dtype == end.dtype
    # TODO(synk): only scalar / shape-(1,) weight (the module default) is
    # handled; arbitrary broadcastable weight tensors are not supported here.
    w = weight.reshape(-1)[:1].astype(jnp.float32)

    orig_shape = x.shape
    n = x.size
    itemsize = jnp.dtype(x.dtype).itemsize
    sub = _sublane_multiple(x.dtype)

    needs_pad = (n % _LANES) != 0
    if not needs_pad:
        # Fast path: pure view, no extra HBM traffic in the wrapper.
        xf = x.reshape(-1, _LANES)
        ef = end.reshape(-1, _LANES)
    else:
        # Rare path: pad flat size up to the dtype-native sublane*lane tile.
        pad = (-n) % (sub * _LANES)
        xf = jnp.pad(x.reshape(-1), (0, pad)).reshape(-1, _LANES)
        ef = jnp.pad(end.reshape(-1), (0, pad)).reshape(-1, _LANES)

    rows = xf.shape[0]
    block_rows = max(sub, _TARGET_BLOCK_BYTES // (_LANES * itemsize))
    block_rows = (block_rows // sub) * sub          # keep sublane-aligned
    if rows <= block_rows:
        block_rows = rows                           # single step; full-dim block is legal

    grid = (pl.cdiv(rows, block_rows),)

    out = pl.pallas_call(
        _lerp_kernel,
        out_shape=jax.ShapeDtypeStruct(xf.shape, x.dtype),
        grid=grid,
        in_specs=[
            pl.BlockSpec(memory_space=pltpu.MemorySpace.SMEM),      # weight scalar
            pl.BlockSpec((block_rows, _LANES), lambda i: (i, 0)),   # input
            pl.BlockSpec((block_rows, _LANES), lambda i: (i, 0)),   # end
        ],
        out_specs=pl.BlockSpec((block_rows, _LANES), lambda i: (i, 0)),
        compiler_params=pltpu.CompilerParams(
            dimension_semantics=("parallel",),       # megacore split on v7x
            vmem_limit_bytes=32 * 1024 * 1024,       # headroom for 2x-buffered blocks
        ),
    )(w, xf, ef)

    if not needs_pad:
        return out.reshape(orig_shape)
    return out.reshape(-1)[:n].reshape(orig_shape)


if __name__ == "__main__":
    key = jax.random.PRNGKey(0)
    k1, k2, k3 = jax.random.split(key, 3)

    # Small shapes consistent with the module: batch=2, channels=4, 16x16 spatial.
    x = jax.random.normal(k1, (2, 4, 16, 16), dtype=jnp.float32)
    end = jax.random.normal(k2, (2, 4, 16, 16), dtype=jnp.float32)
    # nn.Parameter(torch.zeros(1)) default, perturbed so the blend is non-trivial.
    weight = 0.1 * jax.random.normal(k3, (1,), dtype=jnp.float32)

    out = lerp_forward(x, end, weight)
    out = jax.block_until_ready(out)

    # Reference: torch.lerp semantics in plain JAX.
    w_ref = (0.5 + weight[0]).astype(x.dtype)
    ref = x + w_ref * (end - x)

    assert out.shape == x.shape and out.dtype == x.dtype
    assert jnp.allclose(out, ref, atol=1e-6, rtol=1e-6)

    print("KERNEL_OK")
</pallas_src>

<mosaic_0001>
module attributes {stable_mosaic.version = 11 : i64} {
  func.func @_lerp_kernel(%arg0: i32, %arg1: memref<1xf32, #tpu.memory_space<smem>>, %arg2: memref<16x128xf32, #tpu.memory_space<vmem>>, %arg3: memref<16x128xf32, #tpu.memory_space<vmem>>, %arg4: memref<16x128xf32, #tpu.memory_space<vmem>>) attributes {dimension_semantics = [#tpu.dimension_semantics<parallel>], iteration_bounds = array<i64: 1>, scalar_prefetch = 0 : i64, scratch_operands = 0 : i64, tpu.core_type = #tpu.core_type<tc>, window_params = [{transform_indices = @transform_0, window_bounds = array<i64: 1>}, {transform_indices = @transform_1, window_bounds = array<i64: 16, 128>}, {transform_indices = @transform_2, window_bounds = array<i64: 16, 128>}, {transform_indices = @transform_3, window_bounds = array<i64: 16, 128>}]} {
    %c0 = arith.constant 0 : index
    %c0_0 = arith.constant 0 : index
    %0 = vector.load %arg2[%c0, %c0_0] : memref<16x128xf32, #tpu.memory_space<vmem>>, vector<16x128xf32>
    %c0_1 = arith.constant 0 : index
    %c0_2 = arith.constant 0 : index
    %1 = vector.load %arg3[%c0_1, %c0_2] : memref<16x128xf32, #tpu.memory_space<vmem>>, vector<16x128xf32>
    %c0_3 = arith.constant 0 : index
    %2 = memref.load %arg1[%c0_3] : memref<1xf32, #tpu.memory_space<smem>>
    %cst = arith.constant 5.000000e-01 : f32
    %3 = arith.addf %cst, %2 : f32
    %4 = arith.subf %1, %0 : vector<16x128xf32>
    %5 = vector.broadcast %3 : f32 to vector<16x128xf32>
    %6 = arith.mulf %5, %4 : vector<16x128xf32>
    %7 = arith.addf %0, %6 : vector<16x128xf32>
    %c0_4 = arith.constant 0 : index
    %c0_5 = arith.constant 0 : index
    %8 = vector.load %arg4[%c0_4, %c0_5] : memref<16x128xf32, #tpu.memory_space<vmem>>, vector<16x128xf32>
    tpu.vector_store %arg4[%c0_4, %c0_5], %7 {strides = array<i32>} : memref<16x128xf32, #tpu.memory_space<vmem>>, vector<16x128xf32>,
    return
  }
  func.func @transform_0(%arg0: i32) -> i32 {
    %c0_i32 = arith.constant 0 : i32
    %c0_i32_0 = arith.constant 0 : i32
    return %c0_i32 : i32
  }
  func.func @transform_1(%arg0: i32) -> (i32, i32) {
    %c0_i32 = arith.constant 0 : i32
    %c0_i32_0 = arith.constant 0 : i32
    return %arg0, %c0_i32 : i32, i32
  }
  func.func @transform_2(%arg0: i32) -> (i32, i32) {
    %c0_i32 = arith.constant 0 : i32
    %c0_i32_0 = arith.constant 0 : i32
    return %arg0, %c0_i32 : i32, i32
  }
  func.func @transform_3(%arg0: i32) -> (i32, i32) {
    %c0_i32 = arith.constant 0 : i32
    %c0_i32_0 = arith.constant 0 : i32
    return %arg0, %c0_i32 : i32, i32
  }
}

</mosaic_0001>

<llo_original>
// kernel: lerp_forward.1
$region0: #{lerp_forward.1}
  #allocation0 [shape = 'u32[]', space=smem, size = 0x4, offset = 0x4, fixed_abs, tag = 'smem constant byte address 0x4 - core index']
  #allocation1 [shape = 'u32[72,128]{1,0:T(1,128)}', space=vmem, size = 0x9000, scoped, tag = 'internal scratch']
  #allocation2 [shape = 'f32[1]{0:T(128)S(6)}', space=smem, size = 0x200, scoped, tag = 'scoped memory for lerp_forward.1']
  %s0 = inlined_call_operand.<no memory space> [shape: f32[1], index: 0, kind: input, shape index: {}]
  %s1 = inlined_call_operand.vmem [shape: f32[16,128], index: 1, kind: input, shape index: {}]
  %s2 = inlined_call_operand.vmem [shape: f32[16,128], index: 2, kind: input, shape index: {}]
  %s3 = inlined_call_operand.vmem [shape: f32[16,128], index: 3, kind: output, shape index: {}]
  %s4 = sld [smem:[#allocation0]]
  $region22: #{lerp_forward.1} parent=0
    _
  %s6 = ssub.s32 1, %s4
  %s7 = scalar_select 0, %s6, %s4
  %8 = sst [smem:[#allocation2]] %s0
  // Predicated region
  $region2: #{lerp_forward.1} parent=0 // pred_check
    _
  $region3: #{lerp_forward.1} parent=0 // pred_check_branch
    %10 = sbr.rel (0) target = $region5
  $region4: #{lerp_forward.1} parent=0 // pred_region
    _
  $region5: #{lerp_forward.1} parent=0 // pred_fallthru
    _
  // Predicated region
  $region6: #{lerp_forward.1} parent=0 // pred_check
    _
  $region7: #{lerp_forward.1} parent=0 // pred_check_branch
    %12 = sbr.rel (0) target = $region9
  $region8: #{lerp_forward.1} parent=0 // pred_region
    _
  $region9: #{lerp_forward.1} parent=0 // pred_fallthru
    _
  // Predicated region
  $region10: #{lerp_forward.1} parent=0 // pred_check
    _
  $region11: #{lerp_forward.1} parent=0 // pred_check_branch
    %14 = sbr.rel (0) target = $region13
  $region12: #{lerp_forward.1} parent=0 // pred_region
    _
  $region13: #{lerp_forward.1} parent=0 // pred_fallthru
    _
  %v15 = vld [vmem:[%s1] sm:$0xff]
  %v16 = vld [vmem:[%s1 + $0x8] sm:$0xff]
  %v17 = vld [vmem:[%s2] sm:$0xff]
  %v18 = vld [vmem:[%s2 + $0x8] sm:$0xff]
  %s19 = sld [smem:[#allocation2]]
  %s20 = sadd.f32 %s19, 0.5
  %v21 = vsub.f32 %v17, %v15
  %v22 = vsub.f32 %v18, %v16
  %v23 = vstv %s20
  %v24 = vmul.f32 %v23, %v21
  %v25 = vmul.f32 %v23, %v22
  %v26 = vadd.f32 %v15, %v24
  %v27 = vadd.f32 %v16, %v25
  %28 = vst [vmem:[%s3] sm:$0xff] %v26
  %29 = vst [vmem:[%s3 + $0x8] sm:$0xff] %v27
  // Predicated region
  $region14: #{lerp_forward.1} parent=0 // pred_check
    _
  $region15: #{lerp_forward.1} parent=0 // pred_check_branch
    %31 = sbr.rel (0) target = $region17
  $region16: #{lerp_forward.1} parent=0 // pred_region
    _
  $region17: #{lerp_forward.1} parent=0 // pred_fallthru
    _
  // Predicated region
  $region18: #{lerp_forward.1} parent=0 // pred_check
    _
  $region19: #{lerp_forward.1} parent=0 // pred_check_branch
    %33 = sbr.rel (0) target = $region21
  $region20: #{lerp_forward.1} parent=0 // pred_region
    _
  $region21: #{lerp_forward.1} parent=0 // pred_fallthru
    _

</llo_original>
